<compile_context>
chip_gen: v5e
topology: v5e:2x2
jax: 0.10.0
libtpu: 0.0.40
codegen_flags: <defaults>
</compile_context>

<pallas_src>
import jax
import jax.numpy as jnp
from jax import lax
from jax.experimental import pallas as pl
from jax.experimental.pallas import tpu as pltpu


def _round_up(x, m):
    return (x + m - 1) // m * m


def _downsample_kernel(x_ref, w_ref, b_ref, o_ref):
    # x_ref: (1, 4, Hq, Wq, Cin)  -- 2x2 parity (space-to-depth) planes of the padded image
    # w_ref: (3, 3, Cin, TN)      -- conv weights for this Cout tile (lane-padded)
    # b_ref: (1, TN)
    # o_ref: (1, Ho*Wo, TN)
    _, hw, tn = o_ref.shape
    cin = x_ref.shape[-1]
    ho = x_ref.shape[2] - 1
    wo = x_ref.shape[3] - 1

    acc = jnp.zeros((hw, tn), jnp.float32)
    # 3x3 stride-2 conv: tap (kh,kw) reads padded row 2*ho+kh, col 2*wo+kw, which lives in
    # parity plane p = 2*(kh%2)+(kw%2) at (ho + kh//2, wo + kw//2) -> unit-stride slices.
    for kh in range(3):
        for kw in range(3):
            p = 2 * (kh % 2) + (kw % 2)
            rs, cs = kh // 2, kw // 2
            tap = x_ref[0, p, pl.ds(rs, ho), pl.ds(cs, wo), :]        # (Ho, Wo, Cin)
            acc = acc + jnp.dot(tap.reshape(ho * wo, cin), w_ref[kh, kw],
                                preferred_element_type=jnp.float32)
    acc = acc + b_ref[...].astype(jnp.float32)
    o_ref[0] = acc.astype(o_ref.dtype)


def downsample_conv2d_nhwc(x_nhwc, weight, bias):
    """Conv2d(k=3, stride=2, pad=1) on NHWC input. weight: (Cout, Cin, 3, 3), bias: (Cout,).
    Returns (N, Ho, Wo, Cout)."""
    N, H, W, Cin = x_nhwc.shape
    Cout = weight.shape[0]
    Ho = (H + 2 - 3) // 2 + 1
    Wo = (W + 2 - 3) // 2 + 1
    Hq, Wq = Ho + 1, Wo + 1

    # ---- glue: pad (conv padding=1 + round spatial dims up to even) and 2x2 parity split ----
    pad_b = 2 * Hq - H - 1
    pad_r = 2 * Wq - W - 1
    xp = jnp.pad(x_nhwc, ((0, 0), (1, pad_b), (1, pad_r), (0, 0)))    # (N, 2*Hq, 2*Wq, Cin)
    xp = xp.reshape(N, Hq, 2, Wq, 2, Cin)
    x_sd = jnp.transpose(xp, (0, 2, 4, 1, 3, 5)).reshape(N, 4, Hq, Wq, Cin)

    # ---- weights: (Cout, Cin, 3, 3) -> (3, 3, Cin, Coutp), Coutp lane-dense multiple of 128 ----
    Coutp = _round_up(Cout, 128)
    w = jnp.transpose(weight, (2, 3, 1, 0))
    w = jnp.pad(w, ((0, 0), (0, 0), (0, 0), (0, Coutp - Cout))).astype(x_nhwc.dtype)
    b = jnp.pad(bias, (0, Coutp - Cout)).astype(jnp.float32).reshape(1, Coutp)

    TN = 256 if Coutp % 256 == 0 else 128
    grid = (N, Coutp // TN)

    out = pl.pallas_call(
        _downsample_kernel,
        out_shape=jax.ShapeDtypeStruct((N, Ho * Wo, Coutp), x_nhwc.dtype),
        grid_spec=pltpu.PrefetchScalarGridSpec(
            num_scalar_prefetch=0,
            grid=grid,
            in_specs=[
                pl.BlockSpec((1, 4, Hq, Wq, Cin), lambda n, j: (n, 0, 0, 0, 0)),
                pl.BlockSpec((3, 3, Cin, TN), lambda n, j: (0, 0, 0, j)),
                pl.BlockSpec((1, TN), lambda n, j: (0, j)),
            ],
            out_specs=pl.BlockSpec((1, Ho * Wo, TN), lambda n, j: (n, 0, j)),
        ),
        compiler_params=pltpu.CompilerParams(
            dimension_semantics=("parallel", "parallel"),
            vmem_limit_bytes=32 * 1024 * 1024,
        ),
    )(x_sd, w, b)

    return out.reshape(N, Ho, Wo, Coutp)[..., :Cout]


def downsample_conv2d(x_nchw, weight, bias):
    """PyTorch-parity wrapper: NCHW in, NCHW out."""
    x = jnp.transpose(x_nchw, (0, 2, 3, 1))
    out = downsample_conv2d_nhwc(x, weight, bias)
    return jnp.transpose(out, (0, 3, 1, 2))


if __name__ == "__main__":
    key = jax.random.PRNGKey(0)
    kx, kw, kb = jax.random.split(key, 3)

    # Downsample(channels=4, use_conv=True, dims=2, out_channels=8, padding=1)
    N, Cin, H, W = 2, 4, 16, 16
    Cout = 8

    x = jax.random.normal(kx, (N, Cin, H, W), dtype=jnp.float32)
    weight = jax.random.normal(kw, (Cout, Cin, 3, 3), dtype=jnp.float32) * 0.1
    bias = jax.random.normal(kb, (Cout,), dtype=jnp.float32) * 0.1

    out = downsample_conv2d(x, weight, bias)
    jax.block_until_ready(out)

    # correctness check vs XLA conv (same semantics as torch Conv2d stride=2, pad=1)
    ref = lax.conv_general_dilated(
        x, weight, window_strides=(2, 2), padding=((1, 1), (1, 1)),
        dimension_numbers=("NCHW", "OIHW", "NCHW"),
    ) + bias.reshape(1, Cout, 1, 1)
    assert out.shape == (N, Cout, H // 2, W // 2), out.shape
    assert jnp.allclose(out, ref, atol=1e-4, rtol=1e-4)

    print("KERNEL_OK")
</pallas_src>

<mosaic_0001>
module attributes {stable_mosaic.version = 11 : i64} {
  func.func @_downsample_kernel(%arg0: i32, %arg1: i32, %arg2: memref<1x4x9x9x4xf32, #tpu.memory_space<vmem>>, %arg3: memref<3x3x4x128xf32, #tpu.memory_space<vmem>>, %arg4: memref<1x128xf32, #tpu.memory_space<vmem>>, %arg5: memref<1x64x128xf32, #tpu.memory_space<vmem>>) attributes {dimension_semantics = [#tpu.dimension_semantics<parallel>, #tpu.dimension_semantics<parallel>], iteration_bounds = array<i64: 2, 1>, scalar_prefetch = 0 : i64, scratch_operands = 0 : i64, tpu.core_type = #tpu.core_type<tc>, window_params = [{transform_indices = @transform_0, window_bounds = array<i64: 1, 4, 9, 9, 4>}, {transform_indices = @transform_1, window_bounds = array<i64: 3, 3, 4, 128>}, {transform_indices = @transform_2, window_bounds = array<i64: 1, 128>}, {transform_indices = @transform_3, window_bounds = array<i64: 1, 64, 128>}]} {
    %cst = arith.constant 0.000000e+00 : f32
    %0 = vector.broadcast %cst : f32 to vector<64x128xf32>
    %c0 = arith.constant 0 : index
    %c0_0 = arith.constant 0 : index
    %c0_1 = arith.constant 0 : index
    %c0_2 = arith.constant 0 : index
    %c0_3 = arith.constant 0 : index
    %1 = vector.load %arg2[%c0, %c0_0, %c0_1, %c0_2, %c0_3] : memref<1x4x9x9x4xf32, #tpu.memory_space<vmem>>, vector<1x1x8x8x4xf32>
    %2 = vector.shape_cast %1 : vector<1x1x8x8x4xf32> to vector<8x8x4xf32>
    %3 = vector.shape_cast %2 : vector<8x8x4xf32> to vector<64x4xf32>
    %c0_4 = arith.constant 0 : index
    %c0_5 = arith.constant 0 : index
    %c0_6 = arith.constant 0 : index
    %c0_7 = arith.constant 0 : index
    %4 = vector.load %arg3[%c0_4, %c0_5, %c0_6, %c0_7] : memref<3x3x4x128xf32, #tpu.memory_space<vmem>>, vector<1x1x4x128xf32>
    %5 = vector.shape_cast %4 : vector<1x1x4x128xf32> to vector<4x128xf32>
    %cst_8 = arith.constant dense<0.000000e+00> : vector<64x128xf32>
    %6 = tpu.matmul %3, %5, %cst_8 {dimension_numbers = #tpu.dot_dimension_numbers<[1], [0], [0], [1], [0, 0, 1, 1], [], []>} : vector<64x4xf32>, vector<4x128xf32>, vector<64x128xf32> -> vector<64x128xf32>
    %7 = arith.addf %0, %6 : vector<64x128xf32>
    %c0_9 = arith.constant 0 : index
    %c1 = arith.constant 1 : index
    %c0_10 = arith.constant 0 : index
    %c0_11 = arith.constant 0 : index
    %c0_12 = arith.constant 0 : index
    %8 = vector.load %arg2[%c0_9, %c1, %c0_10, %c0_11, %c0_12] : memref<1x4x9x9x4xf32, #tpu.memory_space<vmem>>, vector<1x1x8x8x4xf32>
    %9 = vector.shape_cast %8 : vector<1x1x8x8x4xf32> to vector<8x8x4xf32>
    %10 = vector.shape_cast %9 : vector<8x8x4xf32> to vector<64x4xf32>
    %c0_13 = arith.constant 0 : index
    %c1_14 = arith.constant 1 : index
    %c0_15 = arith.constant 0 : index
    %c0_16 = arith.constant 0 : index
    %11 = vector.load %arg3[%c0_13, %c1_14, %c0_15, %c0_16] : memref<3x3x4x128xf32, #tpu.memory_space<vmem>>, vector<1x1x4x128xf32>
    %12 = vector.shape_cast %11 : vector<1x1x4x128xf32> to vector<4x128xf32>
    %cst_17 = arith.constant dense<0.000000e+00> : vector<64x128xf32>
    %13 = tpu.matmul %10, %12, %cst_17 {dimension_numbers = #tpu.dot_dimension_numbers<[1], [0], [0], [1], [0, 0, 1, 1], [], []>} : vector<64x4xf32>, vector<4x128xf32>, vector<64x128xf32> -> vector<64x128xf32>
    %14 = arith.addf %7, %13 : vector<64x128xf32>
    %c0_18 = arith.constant 0 : index
    %c0_19 = arith.constant 0 : index
    %c0_20 = arith.constant 0 : index
    %c1_21 = arith.constant 1 : index
    %c0_22 = arith.constant 0 : index
    %15 = vector.load %arg2[%c0_18, %c0_19, %c0_20, %c1_21, %c0_22] : memref<1x4x9x9x4xf32, #tpu.memory_space<vmem>>, vector<1x1x8x8x4xf32>
    %16 = vector.shape_cast %15 : vector<1x1x8x8x4xf32> to vector<8x8x4xf32>
    %17 = vector.shape_cast %16 : vector<8x8x4xf32> to vector<64x4xf32>
    %c0_23 = arith.constant 0 : index
    %c2 = arith.constant 2 : index
    %c0_24 = arith.constant 0 : index
    %c0_25 = arith.constant 0 : index
    %18 = vector.load %arg3[%c0_23, %c2, %c0_24, %c0_25] : memref<3x3x4x128xf32, #tpu.memory_space<vmem>>, vector<1x1x4x128xf32>
    %19 = vector.shape_cast %18 : vector<1x1x4x128xf32> to vector<4x128xf32>
    %cst_26 = arith.constant dense<0.000000e+00> : vector<64x128xf32>
    %20 = tpu.matmul %17, %19, %cst_26 {dimension_numbers = #tpu.dot_dimension_numbers<[1], [0], [0], [1], [0, 0, 1, 1], [], []>} : vector<64x4xf32>, vector<4x128xf32>, vector<64x128xf32> -> vector<64x128xf32>
    %21 = arith.addf %14, %20 : vector<64x128xf32>
    %c0_27 = arith.constant 0 : index
    %c2_28 = arith.constant 2 : index
    %c0_29 = arith.constant 0 : index
    %c0_30 = arith.constant 0 : index
    %c0_31 = arith.constant 0 : index
    %22 = vector.load %arg2[%c0_27, %c2_28, %c0_29, %c0_30, %c0_31] : memref<1x4x9x9x4xf32, #tpu.memory_space<vmem>>, vector<1x1x8x8x4xf32>
    %23 = vector.shape_cast %22 : vector<1x1x8x8x4xf32> to vector<8x8x4xf32>
    %24 = vector.shape_cast %23 : vector<8x8x4xf32> to vector<64x4xf32>
    %c1_32 = arith.constant 1 : index
    %c0_33 = arith.constant 0 : index
    %c0_34 = arith.constant 0 : index
    %c0_35 = arith.constant 0 : index
    %25 = vector.load %arg3[%c1_32, %c0_33, %c0_34, %c0_35] : memref<3x3x4x128xf32, #tpu.memory_space<vmem>>, vector<1x1x4x128xf32>
    %26 = vector.shape_cast %25 : vector<1x1x4x128xf32> to vector<4x128xf32>
    %cst_36 = arith.constant dense<0.000000e+00> : vector<64x128xf32>
    %27 = tpu.matmul %24, %26, %cst_36 {dimension_numbers = #tpu.dot_dimension_numbers<[1], [0], [0], [1], [0, 0, 1, 1], [], []>} : vector<64x4xf32>, vector<4x128xf32>, vector<64x128xf32> -> vector<64x128xf32>
    %28 = arith.addf %21, %27 : vector<64x128xf32>
    %c0_37 = arith.constant 0 : index
    %c3 = arith.constant 3 : index
    %c0_38 = arith.constant 0 : index
    %c0_39 = arith.constant 0 : index
    %c0_40 = arith.constant 0 : index
    %29 = vector.load %arg2[%c0_37, %c3, %c0_38, %c0_39, %c0_40] : memref<1x4x9x9x4xf32, #tpu.memory_space<vmem>>, vector<1x1x8x8x4xf32>
    %30 = vector.shape_cast %29 : vector<1x1x8x8x4xf32> to vector<8x8x4xf32>
    %31 = vector.shape_cast %30 : vector<8x8x4xf32> to vector<64x4xf32>
    %c1_41 = arith.constant 1 : index
    %c1_42 = arith.constant 1 : index
    %c0_43 = arith.constant 0 : index
    %c0_44 = arith.constant 0 : index
    %32 = vector.load %arg3[%c1_41, %c1_42, %c0_43, %c0_44] : memref<3x3x4x128xf32, #tpu.memory_space<vmem>>, vector<1x1x4x128xf32>
    %33 = vector.shape_cast %32 : vector<1x1x4x128xf32> to vector<4x128xf32>
    %cst_45 = arith.constant dense<0.000000e+00> : vector<64x128xf32>
    %34 = tpu.matmul %31, %33, %cst_45 {dimension_numbers = #tpu.dot_dimension_numbers<[1], [0], [0], [1], [0, 0, 1, 1], [], []>} : vector<64x4xf32>, vector<4x128xf32>, vector<64x128xf32> -> vector<64x128xf32>
    %35 = arith.addf %28, %34 : vector<64x128xf32>
    %c0_46 = arith.constant 0 : index
    %c2_47 = arith.constant 2 : index
    %c0_48 = arith.constant 0 : index
    %c1_49 = arith.constant 1 : index
    %c0_50 = arith.constant 0 : index
    %36 = vector.load %arg2[%c0_46, %c2_47, %c0_48, %c1_49, %c0_50] : memref<1x4x9x9x4xf32, #tpu.memory_space<vmem>>, vector<1x1x8x8x4xf32>
    %37 = vector.shape_cast %36 : vector<1x1x8x8x4xf32> to vector<8x8x4xf32>
    %38 = vector.shape_cast %37 : vector<8x8x4xf32> to vector<64x4xf32>
    %c1_51 = arith.constant 1 : index
    %c2_52 = arith.constant 2 : index
    %c0_53 = arith.constant 0 : index
    %c0_54 = arith.constant 0 : index
    %39 = vector.load %arg3[%c1_51, %c2_52, %c0_53, %c0_54] : memref<3x3x4x128xf32, #tpu.memory_space<vmem>>, vector<1x1x4x128xf32>
    %40 = vector.shape_cast %39 : vector<1x1x4x128xf32> to vector<4x128xf32>
    %cst_55 = arith.constant dense<0.000000e+00> : vector<64x128xf32>
    %41 = tpu.matmul %38, %40, %cst_55 {dimension_numbers = #tpu.dot_dimension_numbers<[1], [0], [0], [1], [0, 0, 1, 1], [], []>} : vector<64x4xf32>, vector<4x128xf32>, vector<64x128xf32> -> vector<64x128xf32>
    %42 = arith.addf %35, %41 : vector<64x128xf32>
    %c0_56 = arith.constant 0 : index
    %c0_57 = arith.constant 0 : index
    %c1_58 = arith.constant 1 : index
    %c0_59 = arith.constant 0 : index
    %c0_60 = arith.constant 0 : index
    %43 = vector.load %arg2[%c0_56, %c0_57, %c1_58, %c0_59, %c0_60] : memref<1x4x9x9x4xf32, #tpu.memory_space<vmem>>, vector<1x1x8x8x4xf32>
    %44 = vector.shape_cast %43 : vector<1x1x8x8x4xf32> to vector<8x8x4xf32>
    %45 = vector.shape_cast %44 : vector<8x8x4xf32> to vector<64x4xf32>
    %c2_61 = arith.constant 2 : index
    %c0_62 = arith.constant 0 : index
    %c0_63 = arith.constant 0 : index
    %c0_64 = arith.constant 0 : index
    %46 = vector.load %arg3[%c2_61, %c0_62, %c0_63, %c0_64] : memref<3x3x4x128xf32, #tpu.memory_space<vmem>>, vector<1x1x4x128xf32>
    %47 = vector.shape_cast %46 : vector<1x1x4x128xf32> to vector<4x128xf32>
    %cst_65 = arith.constant dense<0.000000e+00> : vector<64x128xf32>
    %48 = tpu.matmul %45, %47, %cst_65 {dimension_numbers = #tpu.dot_dimension_numbers<[1], [0], [0], [1], [0, 0, 1, 1], [], []>} : vector<64x4xf32>, vector<4x128xf32>, vector<64x128xf32> -> vector<64x128xf32>
    %49 = arith.addf %42, %48 : vector<64x128xf32>
    %c0_66 = arith.constant 0 : index
    %c1_67 = arith.constant 1 : index
    %c1_68 = arith.constant 1 : index
    %c0_69 = arith.constant 0 : index
    %c0_70 = arith.constant 0 : index
    %50 = vector.load %arg2[%c0_66, %c1_67, %c1_68, %c0_69, %c0_70] : memref<1x4x9x9x4xf32, #tpu.memory_space<vmem>>, vector<1x1x8x8x4xf32>
    %51 = vector.shape_cast %50 : vector<1x1x8x8x4xf32> to vector<8x8x4xf32>
    %52 = vector.shape_cast %51 : vector<8x8x4xf32> to vector<64x4xf32>
    %c2_71 = arith.constant 2 : index
    %c1_72 = arith.constant 1 : index
    %c0_73 = arith.constant 0 : index
    %c0_74 = arith.constant 0 : index
    %53 = vector.load %arg3[%c2_71, %c1_72, %c0_73, %c0_74] : memref<3x3x4x128xf32, #tpu.memory_space<vmem>>, vector<1x1x4x128xf32>
    %54 = vector.shape_cast %53 : vector<1x1x4x128xf32> to vector<4x128xf32>
    %cst_75 = arith.constant dense<0.000000e+00> : vector<64x128xf32>
    %55 = tpu.matmul %52, %54, %cst_75 {dimension_numbers = #tpu.dot_dimension_numbers<[1], [0], [0], [1], [0, 0, 1, 1], [], []>} : vector<64x4xf32>, vector<4x128xf32>, vector<64x128xf32> -> vector<64x128xf32>
    %56 = arith.addf %49, %55 : vector<64x128xf32>
    %c0_76 = arith.constant 0 : index
    %c0_77 = arith.constant 0 : index
    %c1_78 = arith.constant 1 : index
    %c1_79 = arith.constant 1 : index
    %c0_80 = arith.constant 0 : index
    %57 = vector.load %arg2[%c0_76, %c0_77, %c1_78, %c1_79, %c0_80] : memref<1x4x9x9x4xf32, #tpu.memory_space<vmem>>, vector<1x1x8x8x4xf32>
    %58 = vector.shape_cast %57 : vector<1x1x8x8x4xf32> to vector<8x8x4xf32>
    %59 = vector.shape_cast %58 : vector<8x8x4xf32> to vector<64x4xf32>
    %c2_81 = arith.constant 2 : index
    %c2_82 = arith.constant 2 : index
    %c0_83 = arith.constant 0 : index
    %c0_84 = arith.constant 0 : index
    %60 = vector.load %arg3[%c2_81, %c2_82, %c0_83, %c0_84] : memref<3x3x4x128xf32, #tpu.memory_space<vmem>>, vector<1x1x4x128xf32>
    %61 = vector.shape_cast %60 : vector<1x1x4x128xf32> to vector<4x128xf32>
    %cst_85 = arith.constant dense<0.000000e+00> : vector<64x128xf32>
    %62 = tpu.matmul %59, %61, %cst_85 {dimension_numbers = #tpu.dot_dimension_numbers<[1], [0], [0], [1], [0, 0, 1, 1], [], []>} : vector<64x4xf32>, vector<4x128xf32>, vector<64x128xf32> -> vector<64x128xf32>
    %63 = arith.addf %56, %62 : vector<64x128xf32>
    %c0_86 = arith.constant 0 : index
    %c0_87 = arith.constant 0 : index
    %64 = vector.load %arg4[%c0_86, %c0_87] : memref<1x128xf32, #tpu.memory_space<vmem>>, vector<1x128xf32>
    %65 = vector.broadcast %64 : vector<1x128xf32> to vector<64x128xf32>
    %66 = arith.addf %63, %65 : vector<64x128xf32>
    %c0_88 = arith.constant 0 : index
    %c0_89 = arith.constant 0 : index
    %c0_90 = arith.constant 0 : index
    %67 = vector.load %arg5[%c0_88, %c0_89, %c0_90] : memref<1x64x128xf32, #tpu.memory_space<vmem>>, vector<1x64x128xf32>
    %68 = vector.shape_cast %67 : vector<1x64x128xf32> to vector<64x128xf32>
    %69 = vector.shape_cast %66 : vector<64x128xf32> to vector<1x64x128xf32>
    tpu.vector_store %arg5[%c0_88, %c0_89, %c0_90], %69 {strides = array<i32>} : memref<1x64x128xf32, #tpu.memory_space<vmem>>, vector<1x64x128xf32>,
    return
  }
  func.func @transform_0(%arg0: i32, %arg1: i32) -> (i32, i32, i32, i32, i32) {
    %c0_i32 = arith.constant 0 : i32
    %c0_i32_0 = arith.constant 0 : i32
    %c0_i32_1 = arith.constant 0 : i32
    %c0_i32_2 = arith.constant 0 : i32
    %c0_i32_3 = arith.constant 0 : i32
    return %arg0, %c0_i32, %c0_i32_0, %c0_i32_1, %c0_i32_2 : i32, i32, i32, i32, i32
  }
  func.func @transform_1(%arg0: i32, %arg1: i32) -> (i32, i32, i32, i32) {
    %c0_i32 = arith.constant 0 : i32
    %c0_i32_0 = arith.constant 0 : i32
    %c0_i32_1 = arith.constant 0 : i32
    %c0_i32_2 = arith.constant 0 : i32
    return %c0_i32, %c0_i32_0, %c0_i32_1, %arg1 : i32, i32, i32, i32
  }
  func.func @transform_2(%arg0: i32, %arg1: i32) -> (i32, i32) {
    %c0_i32 = arith.constant 0 : i32
    %c0_i32_0 = arith.constant 0 : i32
    return %c0_i32, %arg1 : i32, i32
  }
  func.func @transform_3(%arg0: i32, %arg1: i32) -> (i32, i32, i32) {
    %c0_i32 = arith.constant 0 : i32
    %c0_i32_0 = arith.constant 0 : i32
    return %arg0, %c0_i32, %arg1 : i32, i32, i32
  }
}

</mosaic_0001>

<llo_original>
// kernel: tpu_custom_call.1
$region0: #{tpu_custom_call.1}
  #allocation0 [shape = 'u32[]', space=smem, size = 0x4, offset = 0x4, fixed_abs, tag = 'smem constant byte address 0x4 - core index']
  #allocation1 [shape = 'u32[72,128]{1,0:T(1,128)}', space=vmem, size = 0x9000, scoped, tag = 'internal scratch']
  %s0 = inlined_call_operand.vmem [shape: f32[2,4,9,9,4], index: 0, kind: input, shape index: {}]
  %s1 = inlined_call_operand.vmem [shape: f32[3,3,4,128], index: 1, kind: input, shape index: {}]
  %s2 = inlined_call_operand.vmem [shape: f32[1,128], index: 2, kind: input, shape index: {}]
  %s3 = inlined_call_operand.hbm [shape: f32[2,64,128], index: 3, kind: output, shape index: {}]
  %s4 = sld [smem:[#allocation0]]
  $region45: #{tpu_custom_call.1} parent=0
    _
  %s6 = ssub.s32 1, %s4
  %s7 = scalar_select 0, %s6, %s4
  $region1: #{tpu_custom_call.1} parent=0
    #allocation2 [shape = 'u8[65536]{0}', space=vmem, size = 0x10000, scoped, tag = 'output window, operand 0']
    #allocation3 [shape = 's32[2]{0}', space=sflag, size = 0x8, scoped, tag = 'scoped memory for tpu_custom_call.1']
    %8 = vsyncpa [#allocation3], 0
    %s9 = scalar_lea.sflag [#allocation3], 1
    %10 = vsyncpa %s9, 0
    loop: start=0, step=1, limit=4
    $region2: #{tpu_custom_call.1} parent=1 // loop_pre_header
      _
    $region3: #{tpu_custom_call.1} parent=1 // loop_header
      %s12 = sphi 0, %s16
      %p13 = scmp.ge.s32.totalorder %s12, 4
      %s19 = sphi 0, %s31
      %s20 = sphi 0, %s27
      %s21 = sphi 0, %s19
      %s22 = sphi 0, %s20
      %s23 = sphi 0, %s21
      %s24 = sphi 0, %s22
      %s34 = sphi 0, %s36
      %s37 = sphi 0, %s34
      %s38 = sphi 0, %s37
      %s54 = sphi 0, %s38
      %s60 = sphi 0, %s62
      %s63 = sphi 0, %s60
      %s64 = sphi 0, %s63
      %s80 = sphi 0, %s64
      %s86 = sphi 0, %s88
      %s89 = sphi 0, %s86
      %s90 = sphi 0, %s89
      %s106 = sphi 0, %s90
      %s114 = sphi 0, %s116
      %s117 = sphi 0, %s114
      %s118 = sphi 0, %s117
      %s134 = sphi 0, %s118
    $region4: #{tpu_custom_call.1} parent=1 // loop_header_branch
      %15 = sbr.rel (%p13) target = $region8
    $region5: #{tpu_custom_call.1} parent=1 // loop_body
      %s17 = ssub.s32 %s12, 1
      %s18 = ssub.s32 %s12, 2
      %s25 = sadd.s32 1, %s20
      %p26 = scmp.ge.s32.totalorder %s25, 1
      %s27 = scalar_select %p26, 0, %s25
      %s28 = sadd.s32 1, %s19
      %s29 = scalar_select %p26, %s28, %s19
      %p30 = scmp.ge.s32.totalorder %s29, 2
      %s31 = scalar_select %p30, 0, %s29
      %s32 = ssub.s32 %s19, %s31
      %p33 = scmp.eq.s32.totalorder %s32, 0
      %s35 = sadd.s32 %s34, 1
      %s36 = scalar_select %p33, %s34, %s35
      %p39 = pneg %p33
      %p40 = scmp.eq.s32.totalorder %s12, 1
      %p41 = por %p39, %p40
      %p42 = scmp.ne.s32.totalorder %s34, %s37
      %p43 = scmp.eq.s32.totalorder %s12, 0
      %p44 = por %p42, %p43
      %p45 = scmp.ne.s32.totalorder %s34, %s37
      %p46 = scmp.eq.s32.totalorder %s17, 1
      %p47 = por %p45, %p46
      %p48 = scmp.ne.s32.totalorder %s37, %s38
      %p49 = scmp.eq.s32.totalorder %s17, 0
      %p50 = por %p48, %p49
      %p51 = scmp.ne.s32.totalorder %s37, %s38
      %p52 = scmp.eq.s32.totalorder %s18, 1
      %p53 = por %p51, %p52
      %p55 = scmp.ne.s32.totalorder %s38, %s54
      %p56 = scmp.eq.s32.totalorder %s18, 0
      %p57 = por %p55, %p56
      %s58 = ssub.s32 %s20, %s27
      %p59 = scmp.eq.s32.totalorder %s58, 0
      %s61 = sadd.s32 %s60, 1
      %s62 = scalar_select %p59, %s60, %s61
      %p65 = pneg %p59
      %p66 = scmp.eq.s32.totalorder %s12, 1
      %p67 = por %p65, %p66
      %p68 = scmp.ne.s32.totalorder %s60, %s63
      %p69 = scmp.eq.s32.totalorder %s12, 0
      %p70 = por %p68, %p69
      %p71 = scmp.ne.s32.totalorder %s60, %s63
      %p72 = scmp.eq.s32.totalorder %s17, 1
      %p73 = por %p71, %p72
      %p74 = scmp.ne.s32.totalorder %s63, %s64
      %p75 = scmp.eq.s32.totalorder %s17, 0
      %p76 = por %p74, %p75
      %p77 = scmp.ne.s32.totalorder %s63, %s64
      %p78 = scmp.eq.s32.totalorder %s18, 1
      %p79 = por %p77, %p78
      %p81 = scmp.ne.s32.totalorder %s64, %s80
      %p82 = scmp.eq.s32.totalorder %s18, 0
      %p83 = por %p81, %p82
      %s84 = ssub.s32 %s20, %s27
      %p85 = scmp.eq.s32.totalorder %s84, 0
      %s87 = sadd.s32 %s86, 1
      %s88 = scalar_select %p85, %s86, %s87
      %p91 = pneg %p85
      %p92 = scmp.eq.s32.totalorder %s12, 1
      %p93 = por %p91, %p92
      %p94 = scmp.ne.s32.totalorder %s86, %s89
      %p95 = scmp.eq.s32.totalorder %s12, 0
      %p96 = por %p94, %p95
      %p97 = scmp.ne.s32.totalorder %s86, %s89
      %p98 = scmp.eq.s32.totalorder %s17, 1
      %p99 = por %p97, %p98
      %p100 = scmp.ne.s32.totalorder %s89, %s90
      %p101 = scmp.eq.s32.totalorder %s17, 0
      %p102 = por %p100, %p101
      %p103 = scmp.ne.s32.totalorder %s89, %s90
      %p104 = scmp.eq.s32.totalorder %s18, 1
      %p105 = por %p103, %p104
      %p107 = scmp.ne.s32.totalorder %s90, %s106
      %p108 = scmp.eq.s32.totalorder %s18, 0
      %p109 = por %p107, %p108
      %s110 = ssub.s32 %s19, %s31
      %s111 = ssub.s32 %s20, %s27
      %s112 = sor.u32 %s110, %s111
      %p113 = scmp.eq.s32.totalorder %s112, 0
      %s115 = sadd.s32 %s114, 1
      %s116 = scalar_select %p113, %s114, %s115
      %p119 = pneg %p113
      %p120 = scmp.eq.s32.totalorder %s12, 1
      %p121 = por %p119, %p120
      %p122 = scmp.ne.s32.totalorder %s114, %s117
      %p123 = scmp.eq.s32.totalorder %s12, 0
      %p124 = por %p122, %p123
      %p125 = scmp.ne.s32.totalorder %s114, %s117
      %p126 = scmp.eq.s32.totalorder %s17, 1
      %p127 = por %p125, %p126
      %p128 = scmp.ne.s32.totalorder %s117, %s118
      %p129 = scmp.eq.s32.totalorder %s17, 0
      %p130 = por %p128, %p129
      %p131 = scmp.ne.s32.totalorder %s117, %s118
      %p132 = scmp.eq.s32.totalorder %s18, 1
      %p133 = por %p131, %p132
      %p135 = scmp.ne.s32.totalorder %s118, %s134
      %p136 = scmp.eq.s32.totalorder %s18, 0
      %p137 = por %p135, %p136
      %p138 = scmp.le.s32.totalorder 1, %s12
      %p139 = scmp.lt.s32.totalorder %s12, 3
      %p140 = pnand %p138, %p139
      %p141 = pneg %p140
      // Predicated region
      $region9: #{tpu_custom_call.1} parent=5 // pred_check
        _
      $region10: #{tpu_custom_call.1} parent=5 // pred_check_branch
        %143 = sbr.rel (%p140) target = $region12
      $region11: #{tpu_custom_call.1} parent=5 // pred_region
        %s144 = ssub.s32 %s12, 1
        // Predicated region
        $region13: #{tpu_custom_call.1} parent=11 // pred_check
          %p145 = pneg %p76
        $region14: #{tpu_custom_call.1} parent=11 // pred_check_branch
          %147 = sbr.rel (%p145) target = $region16
        $region15: #{tpu_custom_call.1} parent=11 // pred_region
          %p148 = scmp.lt.s32.totalorder %s22, 0
          %s149 = scalar_select %p148, %s22, 0
          %s150 = smul.addr %s149, 4
          %s151 = scalar_lea.vmem %s1, %s150
        $region16: #{tpu_custom_call.1} parent=11 // pred_fallthru
          _
        // Predicated region
        $region17: #{tpu_custom_call.1} parent=11 // pred_check
          %p152 = pneg %p102
        $region18: #{tpu_custom_call.1} parent=11 // pred_check_branch
          %154 = sbr.rel (%p152) target = $region20
        $region19: #{tpu_custom_call.1} parent=11 // pred_region
          %p155 = scmp.lt.s32.totalorder %s22, 0
          %s156 = scalar_select %p155, %s22, 0
          %s157 = scalar_lea.vmem %s2, %s156
        $region20: #{tpu_custom_call.1} parent=11 // pred_fallthru
          _
      $region12: #{tpu_custom_call.1} parent=5 // pred_fallthru
        _
      %p158 = scmp.lt.s32.totalorder %s12, 2
      // Predicated region
      $region21: #{tpu_custom_call.1} parent=5 // pred_check
        %p159 = pneg %p158
      $region22: #{tpu_custom_call.1} parent=5 // pred_check_branch
        %161 = sbr.rel (%p159) target = $region24
      $region23: #{tpu_custom_call.1} parent=5 // pred_region
        // Predicated region
        $region25: #{tpu_custom_call.1} parent=23 // pred_check
          %p162 = pneg %p44
        $region26: #{tpu_custom_call.1} parent=23 // pred_check_branch
          %164 = sbr.rel (%p162) target = $region28
        $region27: #{tpu_custom_call.1} parent=23 // pred_region
          %p165 = scmp.lt.s32.totalorder %s19, 1
          %s166 = scalar_select %p165, %s19, 1
          %s167 = smul.addr %s166, 72
          %s168 = smul.addr %s167, 8
          %s169 = scalar_lea.vmem %s0, %s168
        $region28: #{tpu_custom_call.1} parent=23 // pred_fallthru
          _
      $region24: #{tpu_custom_call.1} parent=5 // pred_fallthru
        _
      %p170 = scmp.le.s32.totalorder 1, %s12
      %p171 = scmp.lt.s32.totalorder %s12, 3
      %p172 = pnand %p170, %p171
      %p173 = pneg %p172
      // Predicated region
      $region29: #{tpu_custom_call.1} parent=5 // pred_check
        _
      $region30: #{tpu_custom_call.1} parent=5 // pred_check_branch
        %175 = sbr.rel (%p172) target = $region32
      $region31: #{tpu_custom_call.1} parent=5 // pred_region
        %s176 = ssub.s32 %s12, 1
        %p177 = scmp.lt.s32.totalorder %s21, 1
        %s178 = scalar_select %p177, %s21, 1
        %s179 = smul.addr %s178, 72
        %s180 = smul.addr %s179, 8
        %s181 = scalar_lea.vmem %s0, %s180
        %p182 = pneg %p50
        %p183 = pneg %p47
        %p184 = scmp.lt.s32.totalorder %s22, 0
        %s185 = scalar_select %p184, %s22, 0
        %s186 = smul.addr %s185, 4
        %s187 = scalar_lea.vmem %s1, %s186
        %p188 = pneg %p76
        %p189 = pneg %p73
        %p190 = scmp.lt.s32.totalorder %s22, 0
        %s191 = scalar_select %p190, %s22, 0
        %s192 = scalar_lea.vmem %s2, %s191
        %p193 = pneg %p102
        %p194 = pneg %p99
        %p195 = pneg %p130
        %p196 = pneg %p127
        %s197 = sand.u32 %s117, 1
        %s198 = scalar_lea.sflag [#allocation3], %s197
        %s199 = sand.u32 %s117, 1
        %s200 = smul.addr %s199, 64
        %s201 = scalar_lea.vmem [#allocation2], %s200
        %p202 = scmp.lt.s32.totalorder %s21, 1
        %s203 = scalar_select %p202, %s21, 1
        %s204 = smul.addr %s203, 72
        %s205 = smul.addr %s204, 8
        %s206 = scalar_lea.vmem %s0, %s205
        %p207 = scmp.lt.s32.totalorder %s22, 0
        %s208 = scalar_select %p207, %s22, 0
        %s209 = smul.addr %s208, 4
        %s210 = scalar_lea.vmem %s1, %s209
        %p211 = scmp.lt.s32.totalorder %s22, 0
        %s212 = scalar_select %p211, %s22, 0
        %s213 = scalar_lea.vmem %s2, %s212
        %v214 = vld [vmem:[%s206] sm:$0xff]
        %v215 = vld [vmem:[%s206 + $0x10] sm:$0xff]
        %v216 = vld [vmem:[%s206 + $0x20] sm:$0xff]
        %v217 = vld [vmem:[%s206 + $0x30] sm:$0xff]
        %v218 = vld [vmem:[%s206 + $0x40] sm:$0xff]
        %v219 = vld [vmem:[%s206 + $0x50] sm:$0xff]
        %v220 = vld [vmem:[%s206 + $0x60] sm:$0xff]
        %v221 = vld [vmem:[%s206 + $0x70] sm:$0xff]
        %v222 = vld [vmem:[%s210] sm:$0xf]
        %s223 = scalar_lea.vmem %s206, 144
        %v224 = vld [vmem:[%s223] sm:$0xff]
        %v225 = vld [vmem:[%s223 + $0x10] sm:$0xff]
        %v226 = vld [vmem:[%s223 + $0x20] sm:$0xff]
        %v227 = vld [vmem:[%s223 + $0x30] sm:$0xff]
        %v228 = vld [vmem:[%s223 + $0x40] sm:$0xff]
        %v229 = vld [vmem:[%s223 + $0x50] sm:$0xff]
        %v230 = vld [vmem:[%s223 + $0x60] sm:$0xff]
        %v231 = vld [vmem:[%s223 + $0x70] sm:$0xff]
        %s232 = scalar_lea.vmem %s210, 4
        %v233 = vld [vmem:[%s232] sm:$0xf]
        %vm234 = vcmask 31744
        %v236 = vsel %vm234, %v224, 0
        %v239 = vsel %vm234, %v225, 0
        %v242 = vsel %vm234, %v226, 0
        %v245 = vsel %vm234, %v227, 0
        %v248 = vsel %vm234, %v228, 0
        %v251 = vsel %vm234, %v229, 0
        %v254 = vsel %vm234, %v230, 0
        %v257 = vsel %vm234, %v231, 0
        %vm259 = vcmask 1043456
        %v261 = vsel %vm259, %v233, 0
        %263 = vmatpush.msra.mxu0 0.0
        %264 = vmatpush.msra.mxu0 0.0
        %265 = vmatpush.msra.mxu0 0.0
        %266 = vmatpush.msra.mxu0 0.0
        %267 = vmatpush.msra.mxu0 0.0
        %268 = vmatpush.msra.mxu0 0.0
        %269 = vmatpush.msra.mxu0 0.0
        %270 = vmatpush.msra.mxu0 0.0
        %271 = vmatpush.msra.mxu0 0.0
        %272 = vmatpush.msra.mxu0 0.0
        %273 = vmatpush.msra.mxu0 0.0
        %274 = vmatpush.msra.mxu0 0.0
        %275 = vmatpush.msra.mxu0 0.0
        %276 = vmatpush.msra.mxu0 0.0
        %277 = vmatpush.msra.mxu0 0.0
        %278 = vmatpush.msra.mxu0 %v261
        %279 = vmatmul.f32.gmra.mxu0 %v236
        %v280 = vpop.f32.mrf.mxu0
        %v281 = vadd.f32 0.0, %v280
        %282 = vmatmul.f32.gmra.mxu0 %v239
        %v283 = vpop.f32.mrf.mxu0
        %v284 = vadd.f32 0.0, %v283
        %285 = vmatmul.f32.gmra.mxu0 %v242
        %v286 = vpop.f32.mrf.mxu0
        %v287 = vadd.f32 0.0, %v286
        %288 = vmatmul.f32.gmra.mxu0 %v245
        %v289 = vpop.f32.mrf.mxu0
        %v290 = vadd.f32 0.0, %v289
        %291 = vmatmul.f32.gmra.mxu0 %v248
        %v292 = vpop.f32.mrf.mxu0
        %v293 = vadd.f32 0.0, %v292
        %294 = vmatmul.f32.gmra.mxu0 %v251
        %v295 = vpop.f32.mrf.mxu0
        %v296 = vadd.f32 0.0, %v295
        %297 = vmatmul.f32.gmra.mxu0 %v254
        %v298 = vpop.f32.mrf.mxu0
        %v299 = vadd.f32 0.0, %v298
        %300 = vmatmul.f32.gmra.mxu0 %v257
        %v301 = vpop.f32.mrf.mxu0
        %v302 = vadd.f32 0.0, %v301
        %303 = vdwg.mxu0
        %v305 = vsel %vm234, %v214, 0
        %v308 = vsel %vm234, %v215, 0
        %v311 = vsel %vm234, %v216, 0
        %v314 = vsel %vm234, %v217, 0
        %v317 = vsel %vm234, %v218, 0
        %v320 = vsel %vm234, %v219, 0
        %v323 = vsel %vm234, %v220, 0
        %v326 = vsel %vm234, %v221, 0
        %v329 = vsel %vm259, %v222, 0
        %331 = vmatpush.msra.mxu0 0.0
        %332 = vmatpush.msra.mxu0 0.0
        %333 = vmatpush.msra.mxu0 0.0
        %334 = vmatpush.msra.mxu0 0.0
        %335 = vmatpush.msra.mxu0 0.0
        %336 = vmatpush.msra.mxu0 0.0
        %337 = vmatpush.msra.mxu0 0.0
        %338 = vmatpush.msra.mxu0 0.0
        %339 = vmatpush.msra.mxu0 0.0
        %340 = vmatpush.msra.mxu0 0.0
        %341 = vmatpush.msra.mxu0 0.0
        %342 = vmatpush.msra.mxu0 0.0
        %343 = vmatpush.msra.mxu0 0.0
        %344 = vmatpush.msra.mxu0 0.0
        %345 = vmatpush.msra.mxu0 0.0
        %346 = vmatpush.msra.mxu0 %v329
        %347 = vmatmul.f32.gmra.mxu0 %v305
        %v348 = vpop.f32.mrf.mxu0
        %v349 = vadd.f32 %v281, %v348
        %350 = vmatmul.f32.gmra.mxu0 %v308
        %v351 = vpop.f32.mrf.mxu0
        %v352 = vadd.f32 %v284, %v351
        %353 = vmatmul.f32.gmra.mxu0 %v311
        %v354 = vpop.f32.mrf.mxu0
        %v355 = vadd.f32 %v287, %v354
        %356 = vmatmul.f32.gmra.mxu0 %v314
        %v357 = vpop.f32.mrf.mxu0
        %v358 = vadd.f32 %v290, %v357
        %359 = vmatmul.f32.gmra.mxu0 %v317
        %v360 = vpop.f32.mrf.mxu0
        %v361 = vadd.f32 %v293, %v360
        %362 = vmatmul.f32.gmra.mxu0 %v320
        %v363 = vpop.f32.mrf.mxu0
        %v364 = vadd.f32 %v296, %v363
        %365 = vmatmul.f32.gmra.mxu0 %v323
        %v366 = vpop.f32.mrf.mxu0
        %v367 = vadd.f32 %v299, %v366
        %368 = vmatmul.f32.gmra.mxu0 %v326
        %v369 = vpop.f32.mrf.mxu0
        %v370 = vadd.f32 %v302, %v369
        %371 = vdwg.mxu0
        %v372 = vld [vmem:[%s206 + $0x1] sm:$0xff]
        %v373 = vld [vmem:[%s206 + $0x11] sm:$0xff]
        %v374 = vld [vmem:[%s206 + $0x21] sm:$0xff]
        %v375 = vld [vmem:[%s206 + $0x31] sm:$0xff]
        %v376 = vld [vmem:[%s206 + $0x41] sm:$0xff]
        %v377 = vld [vmem:[%s206 + $0x51] sm:$0xff]
        %v378 = vld [vmem:[%s206 + $0x61] sm:$0xff]
        %v379 = vld [vmem:[%s206 + $0x71] sm:$0xff]
        %s380 = scalar_lea.vmem %s210, 8
        %v381 = vld [vmem:[%s380] sm:$0xf]
        %v383 = vsel %vm234, %v372, 0
        %v386 = vsel %vm234, %v373, 0
        %v389 = vsel %vm234, %v374, 0
        %v392 = vsel %vm234, %v375, 0
        %v395 = vsel %vm234, %v376, 0
        %v398 = vsel %vm234, %v377, 0
        %v401 = vsel %vm234, %v378, 0
        %v404 = vsel %vm234, %v379, 0
        %v407 = vsel %vm259, %v381, 0
        %409 = vmatpush.msra.mxu0 0.0
        %410 = vmatpush.msra.mxu0 0.0
        %411 = vmatpush.msra.mxu0 0.0
        %412 = vmatpush.msra.mxu0 0.0
        %413 = vmatpush.msra.mxu0 0.0
        %414 = vmatpush.msra.mxu0 0.0
        %415 = vmatpush.msra.mxu0 0.0
        %416 = vmatpush.msra.mxu0 0.0
        %417 = vmatpush.msra.mxu0 0.0
        %418 = vmatpush.msra.mxu0 0.0
        %419 = vmatpush.msra.mxu0 0.0
        %420 = vmatpush.msra.mxu0 0.0
        %421 = vmatpush.msra.mxu0 0.0
        %422 = vmatpush.msra.mxu0 0.0
        %423 = vmatpush.msra.mxu0 0.0
        %424 = vmatpush.msra.mxu0 %v407
        %425 = vmatmul.f32.gmra.mxu0 %v383
        %v426 = vpop.f32.mrf.mxu0
        %v427 = vadd.f32 0.0, %v426
        %428 = vmatmul.f32.gmra.mxu0 %v386
        %v429 = vpop.f32.mrf.mxu0
        %v430 = vadd.f32 0.0, %v429
        %431 = vmatmul.f32.gmra.mxu0 %v389
        %v432 = vpop.f32.mrf.mxu0
        %v433 = vadd.f32 0.0, %v432
        %434 = vmatmul.f32.gmra.mxu0 %v392
        %v435 = vpop.f32.mrf.mxu0
        %v436 = vadd.f32 0.0, %v435
        %437 = vmatmul.f32.gmra.mxu0 %v395
        %v438 = vpop.f32.mrf.mxu0
        %v439 = vadd.f32 0.0, %v438
        %440 = vmatmul.f32.gmra.mxu0 %v398
        %v441 = vpop.f32.mrf.mxu0
        %v442 = vadd.f32 0.0, %v441
        %443 = vmatmul.f32.gmra.mxu0 %v401
        %v444 = vpop.f32.mrf.mxu0
        %v445 = vadd.f32 0.0, %v444
        %446 = vmatmul.f32.gmra.mxu0 %v404
        %v447 = vpop.f32.mrf.mxu0
        %v448 = vadd.f32 0.0, %v447
        %449 = vdwg.mxu0
        %v450 = vadd.f32 %v349, %v427
        %v451 = vadd.f32 %v352, %v430
        %v452 = vadd.f32 %v355, %v433
        %v453 = vadd.f32 %v358, %v436
        %v454 = vadd.f32 %v361, %v439
        %v455 = vadd.f32 %v364, %v442
        %v456 = vadd.f32 %v367, %v445
        %v457 = vadd.f32 %v370, %v448
        %s458 = scalar_lea.vmem %s206, 288
        %v459 = vld [vmem:[%s458] sm:$0xff]
        %v460 = vld [vmem:[%s458 + $0x10] sm:$0xff]
        %v461 = vld [vmem:[%s458 + $0x20] sm:$0xff]
        %v462 = vld [vmem:[%s458 + $0x30] sm:$0xff]
        %v463 = vld [vmem:[%s458 + $0x40] sm:$0xff]
        %v464 = vld [vmem:[%s458 + $0x50] sm:$0xff]
        %v465 = vld [vmem:[%s458 + $0x60] sm:$0xff]
        %v466 = vld [vmem:[%s458 + $0x70] sm:$0xff]
        %s467 = scalar_lea.vmem %s210, 12
        %v468 = vld [vmem:[%s467] sm:$0xf]
        %v470 = vsel %vm234, %v459, 0
        %v473 = vsel %vm234, %v460, 0
        %v476 = vsel %vm234, %v461, 0
        %v479 = vsel %vm234, %v462, 0
        %v482 = vsel %vm234, %v463, 0
        %v485 = vsel %vm234, %v464, 0
        %v488 = vsel %vm234, %v465, 0
        %v491 = vsel %vm234, %v466, 0
        %v494 = vsel %vm259, %v468, 0
        %496 = vmatpush.msra.mxu0 0.0
        %497 = vmatpush.msra.mxu0 0.0
        %498 = vmatpush.msra.mxu0 0.0
        %499 = vmatpush.msra.mxu0 0.0
        %500 = vmatpush.msra.mxu0 0.0
        %501 = vmatpush.msra.mxu0 0.0
        %502 = vmatpush.msra.mxu0 0.0
        %503 = vmatpush.msra.mxu0 0.0
        %504 = vmatpush.msra.mxu0 0.0
        %505 = vmatpush.msra.mxu0 0.0
        %506 = vmatpush.msra.mxu0 0.0
        %507 = vmatpush.msra.mxu0 0.0
        %508 = vmatpush.msra.mxu0 0.0
        %509 = vmatpush.msra.mxu0 0.0
        %510 = vmatpush.msra.mxu0 0.0
        %511 = vmatpush.msra.mxu0 %v494
        %512 = vmatmul.f32.gmra.mxu0 %v470
        %v513 = vpop.f32.mrf.mxu0
        %v514 = vadd.f32 0.0, %v513
        %515 = vmatmul.f32.gmra.mxu0 %v473
        %v516 = vpop.f32.mrf.mxu0
        %v517 = vadd.f32 0.0, %v516
        %518 = vmatmul.f32.gmra.mxu0 %v476
        %v519 = vpop.f32.mrf.mxu0
        %v520 = vadd.f32 0.0, %v519
        %521 = vmatmul.f32.gmra.mxu0 %v479
        %v522 = vpop.f32.mrf.mxu0
        %v523 = vadd.f32 0.0, %v522
        %524 = vmatmul.f32.gmra.mxu0 %v482
        %v525 = vpop.f32.mrf.mxu0
        %v526 = vadd.f32 0.0, %v525
        %527 = vmatmul.f32.gmra.mxu0 %v485
        %v528 = vpop.f32.mrf.mxu0
        %v529 = vadd.f32 0.0, %v528
        %530 = vmatmul.f32.gmra.mxu0 %v488
        %v531 = vpop.f32.mrf.mxu0
        %v532 = vadd.f32 0.0, %v531
        %533 = vmatmul.f32.gmra.mxu0 %v491
        %v534 = vpop.f32.mrf.mxu0
        %v535 = vadd.f32 0.0, %v534
        %536 = vdwg.mxu0
        %v537 = vadd.f32 %v450, %v514
        %v538 = vadd.f32 %v451, %v517
        %v539 = vadd.f32 %v452, %v520
        %v540 = vadd.f32 %v453, %v523
        %v541 = vadd.f32 %v454, %v526
        %v542 = vadd.f32 %v455, %v529
        %v543 = vadd.f32 %v456, %v532
        %v544 = vadd.f32 %v457, %v535
        %s545 = scalar_lea.vmem %s206, 432
        %v546 = vld [vmem:[%s545] sm:$0xff]
        %v547 = vld [vmem:[%s545 + $0x10] sm:$0xff]
        %v548 = vld [vmem:[%s545 + $0x20] sm:$0xff]
        %v549 = vld [vmem:[%s545 + $0x30] sm:$0xff]
        %v550 = vld [vmem:[%s545 + $0x40] sm:$0xff]
        %v551 = vld [vmem:[%s545 + $0x50] sm:$0xff]
        %v552 = vld [vmem:[%s545 + $0x60] sm:$0xff]
        %v553 = vld [vmem:[%s545 + $0x70] sm:$0xff]
        %s554 = scalar_lea.vmem %s210, 16
        %v555 = vld [vmem:[%s554] sm:$0xf]
        %v557 = vsel %vm234, %v546, 0
        %v560 = vsel %vm234, %v547, 0
        %v563 = vsel %vm234, %v548, 0
        %v566 = vsel %vm234, %v549, 0
        %v569 = vsel %vm234, %v550, 0
        %v572 = vsel %vm234, %v551, 0
        %v575 = vsel %vm234, %v552, 0
        %v578 = vsel %vm234, %v553, 0
        %v581 = vsel %vm259, %v555, 0
        %583 = vmatpush.msra.mxu0 0.0
        %584 = vmatpush.msra.mxu0 0.0
        %585 = vmatpush.msra.mxu0 0.0
        %586 = vmatpush.msra.mxu0 0.0
        %587 = vmatpush.msra.mxu0 0.0
        %588 = vmatpush.msra.mxu0 0.0
        %589 = vmatpush.msra.mxu0 0.0
        %590 = vmatpush.msra.mxu0 0.0
        %591 = vmatpush.msra.mxu0 0.0
        %592 = vmatpush.msra.mxu0 0.0
        %593 = vmatpush.msra.mxu0 0.0
        %594 = vmatpush.msra.mxu0 0.0
        %595 = vmatpush.msra.mxu0 0.0
        %596 = vmatpush.msra.mxu0 0.0
        %597 = vmatpush.msra.mxu0 0.0
        %598 = vmatpush.msra.mxu0 %v581
        %599 = vmatmul.f32.gmra.mxu0 %v557
        %v600 = vpop.f32.mrf.mxu0
        %v601 = vadd.f32 0.0, %v600
        %602 = vmatmul.f32.gmra.mxu0 %v560
        %v603 = vpop.f32.mrf.mxu0
        %v604 = vadd.f32 0.0, %v603
        %605 = vmatmul.f32.gmra.mxu0 %v563
        %v606 = vpop.f32.mrf.mxu0
        %v607 = vadd.f32 0.0, %v606
        %608 = vmatmul.f32.gmra.mxu0 %v566
        %v609 = vpop.f32.mrf.mxu0
        %v610 = vadd.f32 0.0, %v609
        %611 = vmatmul.f32.gmra.mxu0 %v569
        %v612 = vpop.f32.mrf.mxu0
        %v613 = vadd.f32 0.0, %v612
        %614 = vmatmul.f32.gmra.mxu0 %v572
        %v615 = vpop.f32.mrf.mxu0
        %v616 = vadd.f32 0.0, %v615
        %617 = vmatmul.f32.gmra.mxu0 %v575
        %v618 = vpop.f32.mrf.mxu0
        %v619 = vadd.f32 0.0, %v618
        %620 = vmatmul.f32.gmra.mxu0 %v578
        %v621 = vpop.f32.mrf.mxu0
        %v622 = vadd.f32 0.0, %v621
        %623 = vdwg.mxu0
        %v624 = vadd.f32 %v537, %v601
        %v625 = vadd.f32 %v538, %v604
        %v626 = vadd.f32 %v539, %v607
        %v627 = vadd.f32 %v540, %v610
        %v628 = vadd.f32 %v541, %v613
        %v629 = vadd.f32 %v542, %v616
        %v630 = vadd.f32 %v543, %v619
        %v631 = vadd.f32 %v544, %v622
        %v632 = vld [vmem:[%s458 + $0x1] sm:$0xff]
        %v633 = vld [vmem:[%s458 + $0x11] sm:$0xff]
        %v634 = vld [vmem:[%s458 + $0x21] sm:$0xff]
        %v635 = vld [vmem:[%s458 + $0x31] sm:$0xff]
        %v636 = vld [vmem:[%s458 + $0x41] sm:$0xff]
        %v637 = vld [vmem:[%s458 + $0x51] sm:$0xff]
        %v638 = vld [vmem:[%s458 + $0x61] sm:$0xff]
        %v639 = vld [vmem:[%s458 + $0x71] sm:$0xff]
        %s640 = scalar_lea.vmem %s210, 20
        %v641 = vld [vmem:[%s640] sm:$0xf]
        %v643 = vsel %vm234, %v632, 0
        %v646 = vsel %vm234, %v633, 0
        %v649 = vsel %vm234, %v634, 0
        %v652 = vsel %vm234, %v635, 0
        %v655 = vsel %vm234, %v636, 0
        %v658 = vsel %vm234, %v637, 0
        %v661 = vsel %vm234, %v638, 0
        %v664 = vsel %vm234, %v639, 0
        %v667 = vsel %vm259, %v641, 0
        %669 = vmatpush.msra.mxu0 0.0
        %670 = vmatpush.msra.mxu0 0.0
        %671 = vmatpush.msra.mxu0 0.0
        %672 = vmatpush.msra.mxu0 0.0
        %673 = vmatpush.msra.mxu0 0.0
        %674 = vmatpush.msra.mxu0 0.0
        %675 = vmatpush.msra.mxu0 0.0
        %676 = vmatpush.msra.mxu0 0.0
        %677 = vmatpush.msra.mxu0 0.0
        %678 = vmatpush.msra.mxu0 0.0
        %679 = vmatpush.msra.mxu0 0.0
        %680 = vmatpush.msra.mxu0 0.0
        %681 = vmatpush.msra.mxu0 0.0
        %682 = vmatpush.msra.mxu0 0.0
        %683 = vmatpush.msra.mxu0 0.0
        %684 = vmatpush.msra.mxu0 %v667
        %685 = vmatmul.f32.gmra.mxu0 %v643
        %v686 = vpop.f32.mrf.mxu0
        %v687 = vadd.f32 0.0, %v686
        %688 = vmatmul.f32.gmra.mxu0 %v646
        %v689 = vpop.f32.mrf.mxu0
        %v690 = vadd.f32 0.0, %v689
        %691 = vmatmul.f32.gmra.mxu0 %v649
        %v692 = vpop.f32.mrf.mxu0
        %v693 = vadd.f32 0.0, %v692
        %694 = vmatmul.f32.gmra.mxu0 %v652
        %v695 = vpop.f32.mrf.mxu0
        %v696 = vadd.f32 0.0, %v695
        %697 = vmatmul.f32.gmra.mxu0 %v655
        %v698 = vpop.f32.mrf.mxu0
        %v699 = vadd.f32 0.0, %v698
        %700 = vmatmul.f32.gmra.mxu0 %v658
        %v701 = vpop.f32.mrf.mxu0
        %v702 = vadd.f32 0.0, %v701
        %703 = vmatmul.f32.gmra.mxu0 %v661
        %v704 = vpop.f32.mrf.mxu0
        %v705 = vadd.f32 0.0, %v704
        %706 = vmatmul.f32.gmra.mxu0 %v664
        %v707 = vpop.f32.mrf.mxu0
        %v708 = vadd.f32 0.0, %v707
        %709 = vdwg.mxu0
        %v710 = vadd.f32 %v624, %v687
        %v711 = vadd.f32 %v625, %v690
        %v712 = vadd.f32 %v626, %v693
        %v713 = vadd.f32 %v627, %v696
        %v714 = vadd.f32 %v628, %v699
        %v715 = vadd.f32 %v629, %v702
        %v716 = vadd.f32 %v630, %v705
        %v717 = vadd.f32 %v631, %v708
        %s718 = scalar_lea.vmem %s206, 16
        %v719 = vld [vmem:[%s718] sm:$0xff]
        %v720 = vld [vmem:[%s718 + $0x10] sm:$0xff]
        %v721 = vld [vmem:[%s718 + $0x20] sm:$0xff]
        %v722 = vld [vmem:[%s718 + $0x30] sm:$0xff]
        %v723 = vld [vmem:[%s718 + $0x40] sm:$0xff]
        %v724 = vld [vmem:[%s718 + $0x50] sm:$0xff]
        %v725 = vld [vmem:[%s718 + $0x60] sm:$0xff]
        %v726 = vld [vmem:[%s718 + $0x70] sm:$0xff]
        %s727 = scalar_lea.vmem %s210, 24
        %v728 = vld [vmem:[%s727] sm:$0xf]
        %v730 = vsel %vm234, %v719, 0
        %v733 = vsel %vm234, %v720, 0
        %v736 = vsel %vm234, %v721, 0
        %v739 = vsel %vm234, %v722, 0
        %v742 = vsel %vm234, %v723, 0
        %v745 = vsel %vm234, %v724, 0
        %v748 = vsel %vm234, %v725, 0
        %v751 = vsel %vm234, %v726, 0
        %v754 = vsel %vm259, %v728, 0
        %756 = vmatpush.msra.mxu0 0.0
        %757 = vmatpush.msra.mxu0 0.0
        %758 = vmatpush.msra.mxu0 0.0
        %759 = vmatpush.msra.mxu0 0.0
        %760 = vmatpush.msra.mxu0 0.0
        %761 = vmatpush.msra.mxu0 0.0
        %762 = vmatpush.msra.mxu0 0.0
        %763 = vmatpush.msra.mxu0 0.0
        %764 = vmatpush.msra.mxu0 0.0
        %765 = vmatpush.msra.mxu0 0.0
        %766 = vmatpush.msra.mxu0 0.0
        %767 = vmatpush.msra.mxu0 0.0
        %768 = vmatpush.msra.mxu0 0.0
        %769 = vmatpush.msra.mxu0 0.0
        %770 = vmatpush.msra.mxu0 0.0
        %771 = vmatpush.msra.mxu0 %v754
        %772 = vmatmul.f32.gmra.mxu0 %v730
        %v773 = vpop.f32.mrf.mxu0
        %v774 = vadd.f32 0.0, %v773
        %775 = vmatmul.f32.gmra.mxu0 %v733
        %v776 = vpop.f32.mrf.mxu0
        %v777 = vadd.f32 0.0, %v776
        %778 = vmatmul.f32.gmra.mxu0 %v736
        %v779 = vpop.f32.mrf.mxu0
        %v780 = vadd.f32 0.0, %v779
        %781 = vmatmul.f32.gmra.mxu0 %v739
        %v782 = vpop.f32.mrf.mxu0
        %v783 = vadd.f32 0.0, %v782
        %784 = vmatmul.f32.gmra.mxu0 %v742
        %v785 = vpop.f32.mrf.mxu0
        %v786 = vadd.f32 0.0, %v785
        %787 = vmatmul.f32.gmra.mxu0 %v745
        %v788 = vpop.f32.mrf.mxu0
        %v789 = vadd.f32 0.0, %v788
        %790 = vmatmul.f32.gmra.mxu0 %v748
        %v791 = vpop.f32.mrf.mxu0
        %v792 = vadd.f32 0.0, %v791
        %793 = vmatmul.f32.gmra.mxu0 %v751
        %v794 = vpop.f32.mrf.mxu0
        %v795 = vadd.f32 0.0, %v794
        %796 = vdwg.mxu0
        %v797 = vadd.f32 %v710, %v774
        %v798 = vadd.f32 %v711, %v777
        %v799 = vadd.f32 %v712, %v780
        %v800 = vadd.f32 %v713, %v783
        %v801 = vadd.f32 %v714, %v786
        %v802 = vadd.f32 %v715, %v789
        %v803 = vadd.f32 %v716, %v792
        %v804 = vadd.f32 %v717, %v795
        %s805 = scalar_lea.vmem %s206, 160
        %v806 = vld [vmem:[%s805] sm:$0xff]
        %v807 = vld [vmem:[%s805 + $0x10] sm:$0xff]
        %v808 = vld [vmem:[%s805 + $0x20] sm:$0xff]
        %v809 = vld [vmem:[%s805 + $0x30] sm:$0xff]
        %v810 = vld [vmem:[%s805 + $0x40] sm:$0xff]
        %v811 = vld [vmem:[%s805 + $0x50] sm:$0xff]
        %v812 = vld [vmem:[%s805 + $0x60] sm:$0xff]
        %v813 = vld [vmem:[%s805 + $0x70] sm:$0xff]
        %s814 = scalar_lea.vmem %s210, 28
        %v815 = vld [vmem:[%s814] sm:$0xf]
        %v817 = vsel %vm234, %v806, 0
        %v820 = vsel %vm234, %v807, 0
        %v823 = vsel %vm234, %v808, 0
        %v826 = vsel %vm234, %v809, 0
        %v829 = vsel %vm234, %v810, 0
        %v832 = vsel %vm234, %v811, 0
        %v835 = vsel %vm234, %v812, 0
        %v838 = vsel %vm234, %v813, 0
        %v841 = vsel %vm259, %v815, 0
        %843 = vmatpush.msra.mxu0 0.0
        %844 = vmatpush.msra.mxu0 0.0
        %845 = vmatpush.msra.mxu0 0.0
        %846 = vmatpush.msra.mxu0 0.0
        %847 = vmatpush.msra.mxu0 0.0
        %848 = vmatpush.msra.mxu0 0.0
        %849 = vmatpush.msra.mxu0 0.0
        %850 = vmatpush.msra.mxu0 0.0
        %851 = vmatpush.msra.mxu0 0.0
        %852 = vmatpush.msra.mxu0 0.0
        %853 = vmatpush.msra.mxu0 0.0
        %854 = vmatpush.msra.mxu0 0.0
        %855 = vmatpush.msra.mxu0 0.0
        %856 = vmatpush.msra.mxu0 0.0
        %857 = vmatpush.msra.mxu0 0.0
        %858 = vmatpush.msra.mxu0 %v841
        %859 = vmatmul.f32.gmra.mxu0 %v817
        %v860 = vpop.f32.mrf.mxu0
        %v861 = vadd.f32 0.0, %v860
        %862 = vmatmul.f32.gmra.mxu0 %v820
        %v863 = vpop.f32.mrf.mxu0
        %v864 = vadd.f32 0.0, %v863
        %865 = vmatmul.f32.gmra.mxu0 %v823
        %v866 = vpop.f32.mrf.mxu0
        %v867 = vadd.f32 0.0, %v866
        %868 = vmatmul.f32.gmra.mxu0 %v826
        %v869 = vpop.f32.mrf.mxu0
        %v870 = vadd.f32 0.0, %v869
        %871 = vmatmul.f32.gmra.mxu0 %v829
        %v872 = vpop.f32.mrf.mxu0
        %v873 = vadd.f32 0.0, %v872
        %874 = vmatmul.f32.gmra.mxu0 %v832
        %v875 = vpop.f32.mrf.mxu0
        %v876 = vadd.f32 0.0, %v875
        %877 = vmatmul.f32.gmra.mxu0 %v835
        %v878 = vpop.f32.mrf.mxu0
        %v879 = vadd.f32 0.0, %v878
        %880 = vmatmul.f32.gmra.mxu0 %v838
        %v881 = vpop.f32.mrf.mxu0
        %v882 = vadd.f32 0.0, %v881
        %883 = vdwg.mxu0
        %v884 = vadd.f32 %v797, %v861
        %v885 = vadd.f32 %v798, %v864
        %v886 = vadd.f32 %v799, %v867
        %v887 = vadd.f32 %v800, %v870
        %v888 = vadd.f32 %v801, %v873
        %v889 = vadd.f32 %v802, %v876
        %v890 = vadd.f32 %v803, %v879
        %v891 = vadd.f32 %v804, %v882
        %v892 = vld [vmem:[%s718 + $0x1] sm:$0xff]
        %v893 = vld [vmem:[%s718 + $0x11] sm:$0xff]
        %v894 = vld [vmem:[%s718 + $0x21] sm:$0xff]
        %v895 = vld [vmem:[%s718 + $0x31] sm:$0xff]
        %v896 = vld [vmem:[%s718 + $0x41] sm:$0xff]
        %v897 = vld [vmem:[%s718 + $0x51] sm:$0xff]
        %v898 = vld [vmem:[%s718 + $0x61] sm:$0xff]
        %v899 = vld [vmem:[%s718 + $0x71] sm:$0xff]
        %s900 = scalar_lea.vmem %s210, 32
        %v901 = vld [vmem:[%s900] sm:$0xf]
        %v903 = vsel %vm234, %v892, 0
        %v906 = vsel %vm234, %v893, 0
        %v909 = vsel %vm234, %v894, 0
        %v912 = vsel %vm234, %v895, 0
        %v915 = vsel %vm234, %v896, 0
        %v918 = vsel %vm234, %v897, 0
        %v921 = vsel %vm234, %v898, 0
        %v924 = vsel %vm234, %v899, 0
        %v927 = vsel %vm259, %v901, 0
        %929 = vmatpush.msra.mxu0 0.0
        %930 = vmatpush.msra.mxu0 0.0
        %931 = vmatpush.msra.mxu0 0.0
        %932 = vmatpush.msra.mxu0 0.0
        %933 = vmatpush.msra.mxu0 0.0
        %934 = vmatpush.msra.mxu0 0.0
        %935 = vmatpush.msra.mxu0 0.0
        %936 = vmatpush.msra.mxu0 0.0
        %937 = vmatpush.msra.mxu0 0.0
        %938 = vmatpush.msra.mxu0 0.0
        %939 = vmatpush.msra.mxu0 0.0
        %940 = vmatpush.msra.mxu0 0.0
        %941 = vmatpush.msra.mxu0 0.0
        %942 = vmatpush.msra.mxu0 0.0
        %943 = vmatpush.msra.mxu0 0.0
        %944 = vmatpush.msra.mxu0 %v927
        %945 = vmatmul.f32.gmra.mxu0 %v903
        %v946 = vpop.f32.mrf.mxu0
        %v947 = vadd.f32 0.0, %v946
        %948 = vmatmul.f32.gmra.mxu0 %v906
        %v949 = vpop.f32.mrf.mxu0
        %v950 = vadd.f32 0.0, %v949
        %951 = vmatmul.f32.gmra.mxu0 %v909
        %v952 = vpop.f32.mrf.mxu0
        %v953 = vadd.f32 0.0, %v952
        %954 = vmatmul.f32.gmra.mxu0 %v912
        %v955 = vpop.f32.mrf.mxu0
        %v956 = vadd.f32 0.0, %v955
        %957 = vmatmul.f32.gmra.mxu0 %v915
        %v958 = vpop.f32.mrf.mxu0
        %v959 = vadd.f32 0.0, %v958
        %960 = vmatmul.f32.gmra.mxu0 %v918
        %v961 = vpop.f32.mrf.mxu0
        %v962 = vadd.f32 0.0, %v961
        %963 = vmatmul.f32.gmra.mxu0 %v921
        %v964 = vpop.f32.mrf.mxu0
        %v965 = vadd.f32 0.0, %v964
        %966 = vmatmul.f32.gmra.mxu0 %v924
        %v967 = vpop.f32.mrf.mxu0
        %v968 = vadd.f32 0.0, %v967
        %969 = vdwg.mxu0
        %v970 = vadd.f32 %v884, %v947
        %v971 = vadd.f32 %v885, %v950
        %v972 = vadd.f32 %v886, %v953
        %v973 = vadd.f32 %v887, %v956
        %v974 = vadd.f32 %v888, %v959
        %v975 = vadd.f32 %v889, %v962
        %v976 = vadd.f32 %v890, %v965
        %v977 = vadd.f32 %v891, %v968
        %v978 = vld [vmem:[%s213] sm:$0x1]
        %v980 = vperm.slane %v978, 0
        %v982 = vadd.f32 %v970, %v980
        %v983 = vadd.f32 %v971, %v980
        %v984 = vadd.f32 %v972, %v980
        %v985 = vadd.f32 %v973, %v980
        %v986 = vadd.f32 %v974, %v980
        %v987 = vadd.f32 %v975, %v980
        %v988 = vadd.f32 %v976, %v980
        %v989 = vadd.f32 %v977, %v980
        %990 = vst [vmem:[%s201] sm:$0xff] %v982
        %991 = vst [vmem:[%s201 + $0x8] sm:$0xff] %v983
        %992 = vst [vmem:[%s201 + $0x10] sm:$0xff] %v984
        %993 = vst [vmem:[%s201 + $0x18] sm:$0xff] %v985
        %994 = vst [vmem:[%s201 + $0x20] sm:$0xff] %v986
        %995 = vst [vmem:[%s201 + $0x28] sm:$0xff] %v987
        %996 = vst [vmem:[%s201 + $0x30] sm:$0xff] %v988
        %997 = vst [vmem:[%s201 + $0x38] sm:$0xff] %v989
        %s998 = sand.u32 %s117, 1
        %s999 = scalar_lea.sflag [#allocation3], %s998
        %s1000 = sand.u32 %s117, 1
        %s1001 = smul.addr %s1000, 64
        %s1002 = scalar_lea.vmem [#allocation2], %s1001
        // Predicated region
        $region33: #{tpu_custom_call.1} parent=31 // pred_check
          %p1003 = pneg %p127
        $region34: #{tpu_custom_call.1} parent=31 // pred_check_branch
          %1005 = sbr.rel (%p1003) target = $region36
        $region35: #{tpu_custom_call.1} parent=31 // pred_region
          %1007 = vsyncadd %s999, 0
          %s1008 = smul.addr %s21, 8
          %s1009 = sadd.s32 %s22, %s1008
          %s1010 = smul.addr %s1009, 8
          %s1011 = scalar_lea.hbm %s3, %s1010
          %s1012 = sshll.u32 %s1002, 4
          %s1013 = int_to_ptr.vmem [resolvable:$true] %s1012
          %s1014 = sshll.u32 %s1011, 4
          %s1015 = int_to_ptr.hbm [resolvable:$true] %s1014
          %1020 = dma.vmem_to_hbm [thread:$0]  %s1013, 1024, %s1015, %s999, 128, 128, 8
        $region36: #{tpu_custom_call.1} parent=31 // pred_fallthru
          _
      $region32: #{tpu_custom_call.1} parent=5 // pred_fallthru
        _
      %p1021 = scmp.le.s32.totalorder 2, %s12
      // Predicated region
      $region37: #{tpu_custom_call.1} parent=5 // pred_check
        %p1022 = pneg %p1021
      $region38: #{tpu_custom_call.1} parent=5 // pred_check_branch
        %1024 = sbr.rel (%p1022) target = $region40
      $region39: #{tpu_custom_call.1} parent=5 // pred_region
        %s1025 = ssub.s32 %s12, 2
        // Predicated region
        $region41: #{tpu_custom_call.1} parent=39 // pred_check
          %p1026 = pneg %p133
        $region42: #{tpu_custom_call.1} parent=39 // pred_check_branch
          %1028 = sbr.rel (%p1026) target = $region44
        $region43: #{tpu_custom_call.1} parent=39 // pred_region
          %s1029 = sand.u32 %s118, 1
          %s1030 = scalar_lea.sflag [#allocation3], %s1029
          %s1031 = sand.u32 %s118, 1
          %s1032 = smul.addr %s1031, 64
          %s1033 = scalar_lea.vmem [#allocation2], %s1032
          %1035 = dma.done %s1030, 1024
        $region44: #{tpu_custom_call.1} parent=39 // pred_fallthru
          _
      $region40: #{tpu_custom_call.1} parent=5 // pred_fallthru
        _
    $region6: #{tpu_custom_call.1} parent=1 // loop_footer
      %s16 = sadd.s32 1, %s12
    $region7: #{tpu_custom_call.1} parent=1 // loop_footer_branch
      %11 = sbr.rel target = $region3
    $region8: #{tpu_custom_call.1} parent=1 // loop_exit
      _
    %1036 = vsyncpa [#allocation3], 1
    %s1037 = scalar_lea.sflag [#allocation3], 1
    %1038 = vsyncpa %s1037, 1

</llo_original>
